<compile_context>
chip_gen: v6e
topology: v6e:2x2x1
jax: 0.10.0
libtpu: 0.0.40
codegen_flags: <defaults>
</compile_context>

<pallas_src>
import jax
import jax.numpy as jnp
from jax.experimental import pallas as pl
from jax.experimental.pallas import tpu as pltpu


def _round_up(x, m):
    return (x + m - 1) // m * m


def char_ffn_kernel(ids_ref, w1_ref, b1_ref, w2_ref, b2_ref, o_ref):
    # ids_ref: (TB, S)   int32  ids already offset by position*vocab (streamed)
    # w1_ref : (SVP, H)  bf16   rows >= S*V are zero padding (SVP = round_up(S*V, 128))
    # b1_ref : (1, H)    f32    (resident)
    # w2_ref : (H, OP)   f32    columns >= O are zero padding (OP = round_up(O, 128))
    # b2_ref : (1, O)    f32    (resident)
    # o_ref  : (TB, O)   out dtype
    tb, s = ids_ref.shape
    svp = w1_ref.shape[0]
    o = o_ref.shape[1]

    ids = ids_ref[...]                                          # (TB, S) int32
    lane = jax.lax.broadcasted_iota(jnp.int32, (tb, svp), 1)    # 0..SVP-1 per lane

    # Flattened one-hot built directly in bf16: positions select disjoint lane
    # ranges, so a bool OR over positions followed by a single cast is exact.
    hit = lane == ids[:, 0:1]
    for si in range(1, s):
        hit = jnp.logical_or(hit, lane == ids[:, si:si + 1])
    onehot = hit.astype(jnp.bfloat16)                           # (TB, SVP) lane-dense

    # fc1 + bias + ReLU: bf16 MXU operands, f32 accumulation, f32 bias.
    h = jnp.dot(onehot, w1_ref[...], preferred_element_type=jnp.float32)
    h = jnp.maximum(h + b1_ref[...], 0.0)

    # fc2 + bias in f32 (cost negligible; closer parity with the f32 torch module).
    y = jnp.dot(h, w2_ref[...], preferred_element_type=jnp.float32)
    o_ref[...] = (y[:, :o] + b2_ref[...]).astype(o_ref.dtype)


def char_ffn_from_ids(ids, w1, b1, w2, b2, *, vocab, tb=2048, out_dtype=jnp.float32):
    """Fast path: ids (B, S) int32; w1 (S*V, H); b1 (H,); w2 (H, O); b2 (O,).

    Computes relu(onehot(ids).reshape(B, S*V) @ w1 + b1) @ w2 + b2.
    """
    ids = jnp.clip(ids.astype(jnp.int32), 0, vocab - 1)   # guard OOB ids (torch would raise)
    B, S = ids.shape
    SV, H = w1.shape
    O = w2.shape[1]
    assert SV == S * vocab, "w1 first dim must be sequence_length * vocab"

    SVP = _round_up(SV, 128)   # lane-dense one-hot / fc1 K
    OP = _round_up(O, 128)     # lane-dense fc2 N (kernel slices back to O before the store)

    # Fold per-position lane offsets into the ids: position si selects lane si*V + id.
    ids_off = ids + (jnp.arange(S, dtype=jnp.int32) * vocab)[None, :]

    # Batch tiling: multiple of 8; big tiles to amortize the ~0.35us/step grid
    # overhead, but capped at ceil(B/2) so there are >= 2 grid steps when B allows
    # (keeps both TensorCores busy on v7x via the "parallel" dimension semantics).
    half = _round_up(max((B + 1) // 2, 1), 8)
    TB = max(8, min(_round_up(tb, 8), half))
    B_pad = _round_up(B, TB)
    if B_pad != B:
        ids_off = jnp.pad(ids_off, ((0, B_pad - B), (0, 0)))   # padded rows hit lane 0: harmless

    w1_p = jnp.pad(w1, ((0, SVP - SV), (0, 0))).astype(jnp.bfloat16)   # (SVP, H) resident
    b1_r = b1.reshape(1, H).astype(jnp.float32)
    w2_p = jnp.pad(w2, ((0, 0), (0, OP - O))).astype(jnp.float32)      # (H, OP) resident
    b2_r = b2.reshape(1, O).astype(jnp.float32)

    grid = (B_pad // TB,)

    out_itemsize = jnp.dtype(out_dtype).itemsize
    cost = pl.CostEstimate(
        flops=2 * B_pad * (SVP * H + H * OP),
        transcendentals=0,
        bytes_accessed=(B_pad * S * 4              # ids
                        + SVP * H * 2 + H * 4      # w1 (bf16) + b1
                        + H * OP * 4 + O * 4       # w2 (f32) + b2
                        + B_pad * O * out_itemsize),
    )

    out = pl.pallas_call(
        char_ffn_kernel,
        out_shape=jax.ShapeDtypeStruct((B_pad, O), out_dtype),
        grid_spec=pltpu.PrefetchScalarGridSpec(
            num_scalar_prefetch=0,
            grid=grid,
            in_specs=[
                pl.BlockSpec((TB, S), lambda i: (i, 0)),     # ids: streamed per batch tile
                pl.BlockSpec((SVP, H), lambda i: (0, 0)),    # w1: resident
                pl.BlockSpec((1, H), lambda i: (0, 0)),      # b1: resident
                pl.BlockSpec((H, OP), lambda i: (0, 0)),     # w2: resident
                pl.BlockSpec((1, O), lambda i: (0, 0)),      # b2: resident
            ],
            out_specs=pl.BlockSpec((TB, O), lambda i: (i, 0)),
        ),
        compiler_params=pltpu.CompilerParams(
            dimension_semantics=("parallel",),        # shard batch tiles across TCs (v7x)
            vmem_limit_bytes=32 * 1024 * 1024,        # explicit: v5e scoped default is 16 MiB
        ),
        cost_estimate=cost,
    )(ids_off, w1_p, b1_r, w2_p, b2_r)

    if B_pad != B:
        out = out[:B]          # row padding only; no vocab-axis slice remains
    return out


def char_ffn(x, w1, b1, w2, b2, *, tb=2048, out_dtype=jnp.float32):
    """Module-compatible wrapper: x is the (B, S, V) one-hot float tensor the LM
    feeds CharFFN.  Recovers the char ids and uses the gather-style fast path.
    NOTE: correct only for strictly one-hot x (as produced by the LM); soft inputs
    would be argmax'd, diverging from the dense x @ w1 semantics of the module."""
    vocab = x.shape[-1]
    ids = jnp.argmax(x, axis=-1).astype(jnp.int32)
    return char_ffn_from_ids(ids, w1, b1, w2, b2, vocab=vocab, tb=tb, out_dtype=out_dtype)


def init_params(key, in_dim, hidden, out_dim):
    # Mimic torch.nn.Linear default init: U(-1/sqrt(fan_in), +1/sqrt(fan_in)).
    k1, k2, k3, k4 = jax.random.split(key, 4)
    lim1 = 1.0 / jnp.sqrt(in_dim)
    lim2 = 1.0 / jnp.sqrt(hidden)
    w1 = jax.random.uniform(k1, (in_dim, hidden), jnp.float32, -lim1, lim1)
    b1 = jax.random.uniform(k2, (hidden,), jnp.float32, -lim1, lim1)
    w2 = jax.random.uniform(k3, (hidden, out_dim), jnp.float32, -lim2, lim2)
    b2 = jax.random.uniform(k4, (out_dim,), jnp.float32, -lim2, lim2)
    return w1, b1, w2, b2


if __name__ == "__main__":
    # Shapes consistent with the module: sequence_length=3, hidden_size=128,
    # vocab = 27 (a-z + terminator), output = vocab, input_size = 3 * 27 = 81.
    batch, seq_len, vocab, hidden = 80, 3, 27, 128
    in_dim, out_dim = seq_len * vocab, vocab

    key = jax.random.PRNGKey(0)
    kx, kp = jax.random.split(key)

    ids = jax.random.randint(kx, (batch, seq_len), 0, vocab, dtype=jnp.int32)
    x = jax.nn.one_hot(ids, vocab, dtype=jnp.float32)   # (B, S, V): what the LM feeds CharFFN

    w1, b1, w2, b2 = init_params(kp, in_dim, hidden, out_dim)

    # B=80 -> TB=40, grid=(2,): exercises the multi-step / dual-TensorCore path with
    # no batch padding and no post-kernel slicing at all.
    out = char_ffn(x, w1, b1, w2, b2)
    out = jax.block_until_ready(out)
    assert out.shape == (batch, out_dim), out.shape
    assert out.dtype == jnp.float32

    xf = x.reshape(batch, -1)

    # Reference 1: mirrors the kernel's numerics (bf16 w1, f32 everything else).
    w1b = w1.astype(jnp.bfloat16).astype(jnp.float32)
    ref_mirror = jnp.maximum(xf @ w1b + b1, 0.0) @ w2 + b2
    assert jnp.allclose(out, ref_mirror, atol=1e-2, rtol=1e-2), \
        float(jnp.max(jnp.abs(out - ref_mirror)))

    # Reference 2: exact f32 semantics of the PyTorch module (w1's bf16 rounding is
    # the only remaining difference).
    ref_f32 = jnp.maximum(xf @ w1 + b1, 0.0) @ w2 + b2
    assert jnp.allclose(out, ref_f32, atol=2e-2, rtol=2e-2), \
        float(jnp.max(jnp.abs(out - ref_f32)))

    print("KERNEL_OK")
</pallas_src>

<mosaic_0001>
module attributes {stable_mosaic.version = 11 : i64} {
  func.func @char_ffn_kernel(%arg0: i32, %arg1: memref<40x3xi32, #tpu.memory_space<vmem>>, %arg2: memref<128x128xbf16, #tpu.memory_space<vmem>>, %arg3: memref<1x128xf32, #tpu.memory_space<vmem>>, %arg4: memref<128x128xf32, #tpu.memory_space<vmem>>, %arg5: memref<1x27xf32, #tpu.memory_space<vmem>>, %arg6: memref<40x27xf32, #tpu.memory_space<vmem>>) attributes {dimension_semantics = [#tpu.dimension_semantics<parallel>], iteration_bounds = array<i64: 2>, scalar_prefetch = 0 : i64, scratch_operands = 0 : i64, tpu.core_type = #tpu.core_type<tc>, window_params = [{transform_indices = @transform_0, window_bounds = array<i64: 40, 3>}, {pipeline_mode = #tpu.pipeline_mode<synchronous>, transform_indices = @transform_1, window_bounds = array<i64: 128, 128>}, {pipeline_mode = #tpu.pipeline_mode<synchronous>, transform_indices = @transform_2, window_bounds = array<i64: 1, 128>}, {pipeline_mode = #tpu.pipeline_mode<synchronous>, transform_indices = @transform_3, window_bounds = array<i64: 128, 128>}, {pipeline_mode = #tpu.pipeline_mode<synchronous>, transform_indices = @transform_4, window_bounds = array<i64: 1, 27>}, {transform_indices = @transform_5, window_bounds = array<i64: 40, 27>}]} {
    %c0 = arith.constant 0 : index
    %c0_0 = arith.constant 0 : index
    %0 = vector.load %arg1[%c0, %c0_0] : memref<40x3xi32, #tpu.memory_space<vmem>>, vector<40x3xi32>
    %1 = tpu.iota {dimensions = array<i32: 1>} : vector<40x128xi32>
    %2 = vector.extract_strided_slice %0 {offsets = [0, 0], sizes = [40, 1], strides = [1, 1]} : vector<40x3xi32> to vector<40x1xi32>
    %3 = vector.broadcast %2 : vector<40x1xi32> to vector<40x128xi32>
    %4 = arith.cmpi eq, %1, %3 : vector<40x128xi32>
    %5 = vector.extract_strided_slice %0 {offsets = [0, 1], sizes = [40, 1], strides = [1, 1]} : vector<40x3xi32> to vector<40x1xi32>
    %6 = vector.broadcast %5 : vector<40x1xi32> to vector<40x128xi32>
    %7 = arith.cmpi eq, %1, %6 : vector<40x128xi32>
    %8 = arith.ori %4, %7 : vector<40x128xi1>
    %9 = vector.extract_strided_slice %0 {offsets = [0, 2], sizes = [40, 1], strides = [1, 1]} : vector<40x3xi32> to vector<40x1xi32>
    %10 = vector.broadcast %9 : vector<40x1xi32> to vector<40x128xi32>
    %11 = arith.cmpi eq, %1, %10 : vector<40x128xi32>
    %12 = arith.ori %8, %11 : vector<40x128xi1>
    %13 = arith.extui %12 : vector<40x128xi1> to vector<40x128xi32>
    %14 = arith.sitofp %13 : vector<40x128xi32> to vector<40x128xf32>
    %15 = arith.truncf %14 : vector<40x128xf32> to vector<40x128xbf16>
    %c0_1 = arith.constant 0 : index
    %c0_2 = arith.constant 0 : index
    %16 = vector.load %arg2[%c0_1, %c0_2] : memref<128x128xbf16, #tpu.memory_space<vmem>>, vector<128x128xbf16>
    %cst = arith.constant dense<0.000000e+00> : vector<40x128xf32>
    %17 = tpu.matmul %15, %16, %cst {dimension_numbers = #tpu.dot_dimension_numbers<[1], [0], [0], [1], [0, 0, 1, 1], [], []>} : vector<40x128xbf16>, vector<128x128xbf16>, vector<40x128xf32> -> vector<40x128xf32>
    %c0_3 = arith.constant 0 : index
    %c0_4 = arith.constant 0 : index
    %18 = vector.load %arg3[%c0_3, %c0_4] : memref<1x128xf32, #tpu.memory_space<vmem>>, vector<1x128xf32>
    %19 = vector.broadcast %18 : vector<1x128xf32> to vector<40x128xf32>
    %20 = arith.addf %17, %19 : vector<40x128xf32>
    %cst_5 = arith.constant 0.000000e+00 : f32
    %21 = vector.broadcast %cst_5 : f32 to vector<40x128xf32>
    %22 = arith.maximumf %20, %21 : vector<40x128xf32>
    %c0_6 = arith.constant 0 : index
    %c0_7 = arith.constant 0 : index
    %23 = vector.load %arg4[%c0_6, %c0_7] : memref<128x128xf32, #tpu.memory_space<vmem>>, vector<128x128xf32>
    %cst_8 = arith.constant dense<0.000000e+00> : vector<40x128xf32>
    %24 = tpu.matmul %22, %23, %cst_8 {dimension_numbers = #tpu.dot_dimension_numbers<[1], [0], [0], [1], [0, 0, 1, 1], [], []>} : vector<40x128xf32>, vector<128x128xf32>, vector<40x128xf32> -> vector<40x128xf32>
    %25 = vector.extract_strided_slice %24 {offsets = [0, 0], sizes = [40, 27], strides = [1, 1]} : vector<40x128xf32> to vector<40x27xf32>
    %c0_9 = arith.constant 0 : index
    %c0_10 = arith.constant 0 : index
    %26 = vector.load %arg5[%c0_9, %c0_10] : memref<1x27xf32, #tpu.memory_space<vmem>>, vector<1x27xf32>
    %27 = vector.broadcast %26 : vector<1x27xf32> to vector<40x27xf32>
    %28 = arith.addf %25, %27 : vector<40x27xf32>
    %c0_11 = arith.constant 0 : index
    %c0_12 = arith.constant 0 : index
    %29 = vector.load %arg6[%c0_11, %c0_12] : memref<40x27xf32, #tpu.memory_space<vmem>>, vector<40x27xf32>
    tpu.vector_store %arg6[%c0_11, %c0_12], %28 {strides = array<i32>} : memref<40x27xf32, #tpu.memory_space<vmem>>, vector<40x27xf32>,
    return
  }
  func.func @transform_0(%arg0: i32) -> (i32, i32) {
    %c0_i32 = arith.constant 0 : i32
    %c0_i32_0 = arith.constant 0 : i32
    return %arg0, %c0_i32 : i32, i32
  }
  func.func @transform_1(%arg0: i32) -> (i32, i32) {
    %c0_i32 = arith.constant 0 : i32
    %c0_i32_0 = arith.constant 0 : i32
    %c0_i32_1 = arith.constant 0 : i32
    return %c0_i32, %c0_i32_0 : i32, i32
  }
  func.func @transform_2(%arg0: i32) -> (i32, i32) {
    %c0_i32 = arith.constant 0 : i32
    %c0_i32_0 = arith.constant 0 : i32
    %c0_i32_1 = arith.constant 0 : i32
    return %c0_i32, %c0_i32_0 : i32, i32
  }
  func.func @transform_3(%arg0: i32) -> (i32, i32) {
    %c0_i32 = arith.constant 0 : i32
    %c0_i32_0 = arith.constant 0 : i32
    %c0_i32_1 = arith.constant 0 : i32
    return %c0_i32, %c0_i32_0 : i32, i32
  }
  func.func @transform_4(%arg0: i32) -> (i32, i32) {
    %c0_i32 = arith.constant 0 : i32
    %c0_i32_0 = arith.constant 0 : i32
    %c0_i32_1 = arith.constant 0 : i32
    return %c0_i32, %c0_i32_0 : i32, i32
  }
  func.func @transform_5(%arg0: i32) -> (i32, i32) {
    %c0_i32 = arith.constant 0 : i32
    %c0_i32_0 = arith.constant 0 : i32
    return %arg0, %c0_i32 : i32, i32
  }
}

</mosaic_0001>

<llo_original>
// kernel: tpu_custom_call.1
$region0: #{tpu_custom_call.1}
  #allocation0 [shape = 'u32[]', space=smem, size = 0x4, offset = 0x4, fixed_abs, tag = 'smem constant byte address 0x4 - core index']
  #allocation1 [shape = 'u32[144,128]{1,0:T(1,128)}', space=vmem, size = 0x12000, scoped, tag = 'internal scratch']
  %s0 = inlined_call_operand.vmem [shape: s32[80,3], index: 0, kind: input, shape index: {}]
  %s1 = inlined_call_operand.vmem [shape: bf16[128,128], index: 1, kind: input, shape index: {}]
  %s2 = inlined_call_operand.vmem [shape: f32[1,128], index: 2, kind: input, shape index: {}]
  %s3 = inlined_call_operand.hbm [shape: f32[128,128], index: 3, kind: input, shape index: {}]
  %s4 = inlined_call_operand.vmem [shape: f32[1,27], index: 4, kind: input, shape index: {}]
  %s5 = inlined_call_operand.vmem [shape: f32[80,27], index: 5, kind: output, shape index: {}]
  %s6 = sld [smem:[#allocation0]]
  $region57: #{tpu_custom_call.1} parent=0
    _
  %s8 = ssub.s32 1, %s6
  %s9 = scalar_select 0, %s8, %s6
  $region1: #{tpu_custom_call.1} parent=0
    #allocation2 [shape = 'u8[65536]{0}', space=vmem, size = 0x10000, scoped, tag = 'input window, operand 3, single buffered']
    #allocation3 [shape = 's32[2]{0}', space=sflag, size = 0x8, scoped, tag = 'scoped memory for tpu_custom_call.1']
    %10 = vsyncpa [#allocation3], 0
    loop: start=0, step=1, limit=4
    $region2: #{tpu_custom_call.1} parent=1 // loop_pre_header
      _
    $region3: #{tpu_custom_call.1} parent=1 // loop_header
      %s12 = sphi 0, %s16
      %p13 = scmp.ge.s32.totalorder %s12, 4
      %s22 = sphi 0, %s24
      %s25 = sphi 0, %s22
      %s26 = sphi 0, %s25
      %s42 = sphi 0, %s26
      %s46 = sphi 0, %s46
      %s48 = sphi 0, %s46
      %s49 = sphi 0, %s48
      %s63 = sphi 0, %s49
      %s67 = sphi 0, %s67
      %s69 = sphi 0, %s67
      %s70 = sphi 0, %s69
      %s84 = sphi 0, %s70
      %s88 = sphi 0, %s88
      %s90 = sphi 0, %s88
      %s91 = sphi 0, %s90
      %s105 = sphi 0, %s91
      %s109 = sphi 0, %s109
      %s111 = sphi 0, %s109
      %s112 = sphi 0, %s111
      %s126 = sphi 0, %s112
      %s132 = sphi 0, %s134
      %s135 = sphi 0, %s132
      %s136 = sphi 0, %s135
      %s152 = sphi 0, %s136
    $region4: #{tpu_custom_call.1} parent=1 // loop_header_branch
      %15 = sbr.rel (%p13) target = $region8
    $region5: #{tpu_custom_call.1} parent=1 // loop_body
      %s17 = ssub.s32 %s12, 1
      %s18 = ssub.s32 %s12, 2
      %s19 = sadd.s32 %s12, 1
      %s20 = ssub.s32 %s12, %s19
      %p21 = scmp.eq.s32.totalorder %s20, 0
      %s23 = sadd.s32 %s22, 1
      %s24 = scalar_select %p21, %s22, %s23
      %p27 = pneg %p21
      %p28 = scmp.eq.s32.totalorder %s12, 1
      %p29 = por %p27, %p28
      %p30 = scmp.ne.s32.totalorder %s22, %s25
      %p31 = scmp.eq.s32.totalorder %s12, 0
      %p32 = por %p30, %p31
      %p33 = scmp.ne.s32.totalorder %s22, %s25
      %p34 = scmp.eq.s32.totalorder %s17, 1
      %p35 = por %p33, %p34
      %p36 = scmp.ne.s32.totalorder %s25, %s26
      %p37 = scmp.eq.s32.totalorder %s17, 0
      %p38 = por %p36, %p37
      %p39 = scmp.ne.s32.totalorder %s25, %s26
      %p40 = scmp.eq.s32.totalorder %s18, 1
      %p41 = por %p39, %p40
      %p43 = scmp.ne.s32.totalorder %s26, %s42
      %p44 = scmp.eq.s32.totalorder %s18, 0
      %p45 = por %p43, %p44
      %s47 = sadd.s32 %s46, 1
      %p50 = scmp.eq.s32.totalorder %s12, 1
      %p51 = scmp.ne.s32.totalorder %s46, %s48
      %p52 = scmp.eq.s32.totalorder %s12, 0
      %p53 = por %p51, %p52
      %p54 = scmp.ne.s32.totalorder %s46, %s48
      %p55 = scmp.eq.s32.totalorder %s17, 1
      %p56 = por %p54, %p55
      %p57 = scmp.ne.s32.totalorder %s48, %s49
      %p58 = scmp.eq.s32.totalorder %s17, 0
      %p59 = por %p57, %p58
      %p60 = scmp.ne.s32.totalorder %s48, %s49
      %p61 = scmp.eq.s32.totalorder %s18, 1
      %p62 = por %p60, %p61
      %p64 = scmp.ne.s32.totalorder %s49, %s63
      %p65 = scmp.eq.s32.totalorder %s18, 0
      %p66 = por %p64, %p65
      %s68 = sadd.s32 %s67, 1
      %p71 = scmp.eq.s32.totalorder %s12, 1
      %p72 = scmp.ne.s32.totalorder %s67, %s69
      %p73 = scmp.eq.s32.totalorder %s12, 0
      %p74 = por %p72, %p73
      %p75 = scmp.ne.s32.totalorder %s67, %s69
      %p76 = scmp.eq.s32.totalorder %s17, 1
      %p77 = por %p75, %p76
      %p78 = scmp.ne.s32.totalorder %s69, %s70
      %p79 = scmp.eq.s32.totalorder %s17, 0
      %p80 = por %p78, %p79
      %p81 = scmp.ne.s32.totalorder %s69, %s70
      %p82 = scmp.eq.s32.totalorder %s18, 1
      %p83 = por %p81, %p82
      %p85 = scmp.ne.s32.totalorder %s70, %s84
      %p86 = scmp.eq.s32.totalorder %s18, 0
      %p87 = por %p85, %p86
      %s89 = sadd.s32 %s88, 1
      %p92 = scmp.eq.s32.totalorder %s12, 1
      %p93 = scmp.ne.s32.totalorder %s88, %s90
      %p94 = scmp.eq.s32.totalorder %s12, 0
      %p95 = por %p93, %p94
      %p96 = scmp.ne.s32.totalorder %s88, %s90
      %p97 = scmp.eq.s32.totalorder %s17, 1
      %p98 = por %p96, %p97
      %p99 = scmp.ne.s32.totalorder %s90, %s91
      %p100 = scmp.eq.s32.totalorder %s17, 0
      %p101 = por %p99, %p100
      %p102 = scmp.ne.s32.totalorder %s90, %s91
      %p103 = scmp.eq.s32.totalorder %s18, 1
      %p104 = por %p102, %p103
      %p106 = scmp.ne.s32.totalorder %s91, %s105
      %p107 = scmp.eq.s32.totalorder %s18, 0
      %p108 = por %p106, %p107
      %s110 = sadd.s32 %s109, 1
      %p113 = scmp.eq.s32.totalorder %s12, 1
      %p114 = scmp.ne.s32.totalorder %s109, %s111
      %p115 = scmp.eq.s32.totalorder %s12, 0
      %p116 = por %p114, %p115
      %p117 = scmp.ne.s32.totalorder %s109, %s111
      %p118 = scmp.eq.s32.totalorder %s17, 1
      %p119 = por %p117, %p118
      %p120 = scmp.ne.s32.totalorder %s111, %s112
      %p121 = scmp.eq.s32.totalorder %s17, 0
      %p122 = por %p120, %p121
      %p123 = scmp.ne.s32.totalorder %s111, %s112
      %p124 = scmp.eq.s32.totalorder %s18, 1
      %p125 = por %p123, %p124
      %p127 = scmp.ne.s32.totalorder %s112, %s126
      %p128 = scmp.eq.s32.totalorder %s18, 0
      %p129 = por %p127, %p128
      %s130 = ssub.s32 %s12, %s19
      %p131 = scmp.eq.s32.totalorder %s130, 0
      %s133 = sadd.s32 %s132, 1
      %s134 = scalar_select %p131, %s132, %s133
      %p137 = pneg %p131
      %p138 = scmp.eq.s32.totalorder %s12, 1
      %p139 = por %p137, %p138
      %p140 = scmp.ne.s32.totalorder %s132, %s135
      %p141 = scmp.eq.s32.totalorder %s12, 0
      %p142 = por %p140, %p141
      %p143 = scmp.ne.s32.totalorder %s132, %s135
      %p144 = scmp.eq.s32.totalorder %s17, 1
      %p145 = por %p143, %p144
      %p146 = scmp.ne.s32.totalorder %s135, %s136
      %p147 = scmp.eq.s32.totalorder %s17, 0
      %p148 = por %p146, %p147
      %p149 = scmp.ne.s32.totalorder %s135, %s136
      %p150 = scmp.eq.s32.totalorder %s18, 1
      %p151 = por %p149, %p150
      %p153 = scmp.ne.s32.totalorder %s136, %s152
      %p154 = scmp.eq.s32.totalorder %s18, 0
      %p155 = por %p153, %p154
      %p156 = scmp.le.s32.totalorder 1, %s12
      %p157 = scmp.lt.s32.totalorder %s12, 3
      %p158 = pnand %p156, %p157
      %p159 = pneg %p158
      // Predicated region
      $region9: #{tpu_custom_call.1} parent=5 // pred_check
        _
      $region10: #{tpu_custom_call.1} parent=5 // pred_check_branch
        %161 = sbr.rel (%p158) target = $region12
      $region11: #{tpu_custom_call.1} parent=5 // pred_region
        %s162 = ssub.s32 %s12, 1
        // Predicated region
        $region13: #{tpu_custom_call.1} parent=11 // pred_check
          %p163 = pneg %p59
        $region14: #{tpu_custom_call.1} parent=11 // pred_check_branch
          %165 = sbr.rel (%p163) target = $region16
        $region15: #{tpu_custom_call.1} parent=11 // pred_region
          _
        $region16: #{tpu_custom_call.1} parent=11 // pred_fallthru
          _
        // Predicated region
        $region17: #{tpu_custom_call.1} parent=11 // pred_check
          %p166 = pneg %p80
        $region18: #{tpu_custom_call.1} parent=11 // pred_check_branch
          %168 = sbr.rel (%p166) target = $region20
        $region19: #{tpu_custom_call.1} parent=11 // pred_region
          _
        $region20: #{tpu_custom_call.1} parent=11 // pred_fallthru
          _
        // Predicated region
        $region21: #{tpu_custom_call.1} parent=11 // pred_check
          %p169 = pneg %p101
        $region22: #{tpu_custom_call.1} parent=11 // pred_check_branch
          %171 = sbr.rel (%p169) target = $region24
        $region23: #{tpu_custom_call.1} parent=11 // pred_region
          %s173 = ssub.s32 2048, 2048
          %174 = vsyncadd [#allocation3], %s173
          %s175 = sshll.u32 [#allocation2], 4
          %s176 = int_to_ptr.vmem [resolvable:$true] %s175
          %181 = dma.hbm_to_vmem [thread:$0]  %s3, 2048, %s176, [#allocation3], 128, 128, 8
        $region24: #{tpu_custom_call.1} parent=11 // pred_fallthru
          _
        // Predicated region
        $region25: #{tpu_custom_call.1} parent=11 // pred_check
          %p182 = pneg %p122
        $region26: #{tpu_custom_call.1} parent=11 // pred_check_branch
          %184 = sbr.rel (%p182) target = $region28
        $region27: #{tpu_custom_call.1} parent=11 // pred_region
          _
        $region28: #{tpu_custom_call.1} parent=11 // pred_fallthru
          _
      $region12: #{tpu_custom_call.1} parent=5 // pred_fallthru
        _
      %p185 = scmp.lt.s32.totalorder %s12, 2
      // Predicated region
      $region29: #{tpu_custom_call.1} parent=5 // pred_check
        %p186 = pneg %p185
      $region30: #{tpu_custom_call.1} parent=5 // pred_check_branch
        %188 = sbr.rel (%p186) target = $region32
      $region31: #{tpu_custom_call.1} parent=5 // pred_region
        // Predicated region
        $region33: #{tpu_custom_call.1} parent=31 // pred_check
          %p189 = pneg %p32
        $region34: #{tpu_custom_call.1} parent=31 // pred_check_branch
          %191 = sbr.rel (%p189) target = $region36
        $region35: #{tpu_custom_call.1} parent=31 // pred_region
          %s192 = smul.u32 5, %s12
          %p193 = scmp.lt.s32.totalorder %s192, 9
          %s194 = scalar_select %p193, %s192, 9
          %s195 = smul.addr %s194, 8
          %s196 = scalar_lea.vmem %s0, %s195
          %s197 = smul.u32 5, %s12
        $region36: #{tpu_custom_call.1} parent=31 // pred_fallthru
          _
      $region32: #{tpu_custom_call.1} parent=5 // pred_fallthru
        _
      %p198 = scmp.le.s32.totalorder 1, %s12
      %p199 = scmp.lt.s32.totalorder %s12, 3
      %p200 = pnand %p198, %p199
      %p201 = pneg %p200
      // Predicated region
      $region37: #{tpu_custom_call.1} parent=5 // pred_check
        _
      $region38: #{tpu_custom_call.1} parent=5 // pred_check_branch
        %203 = sbr.rel (%p200) target = $region40
      $region39: #{tpu_custom_call.1} parent=5 // pred_region
        %s204 = ssub.s32 %s12, 1
        // Predicated region
        $region41: #{tpu_custom_call.1} parent=39 // pred_check
          %p205 = pneg %p101
        $region42: #{tpu_custom_call.1} parent=39 // pred_check_branch
          %207 = sbr.rel (%p205) target = $region44
        $region43: #{tpu_custom_call.1} parent=39 // pred_region
          %208 = dma.done [#allocation3], 2048
        $region44: #{tpu_custom_call.1} parent=39 // pred_fallthru
          _
        %s209 = smul.u32 5, %s17
        %p210 = scmp.lt.s32.totalorder %s209, 9
        %s211 = scalar_select %p210, %s209, 9
        %s212 = smul.addr %s211, 8
        %s213 = scalar_lea.vmem %s0, %s212
        %p214 = pneg %p38
        %p215 = pneg %p35
        %p216 = pneg %p59
        %p217 = pneg %p56
        %p218 = pneg %p80
        %p219 = pneg %p77
        %p220 = pneg %p101
        %p221 = pneg %p98
        %p222 = pneg %p122
        %p223 = pneg %p119
        %p224 = pneg %p148
        %p225 = pneg %p145
        %s226 = smul.u32 5, %s17
        %p227 = scmp.lt.s32.totalorder %s226, 9
        %s228 = scalar_select %p227, %s226, 9
        %s229 = smul.addr %s228, 8
        %s230 = scalar_lea.vmem %s5, %s229
        %s231 = smul.u32 5, %s17
        %p232 = scmp.lt.s32.totalorder %s231, 9
        %s233 = scalar_select %p232, %s231, 9
        %s234 = smul.addr %s233, 8
        %s235 = scalar_lea.vmem %s0, %s234
        %s236 = smul.u32 5, %s17
        %s237 = smul.u32 5, %s17
        %p238 = scmp.lt.s32.totalorder %s237, 9
        %s239 = scalar_select %p238, %s237, 9
        %s240 = smul.addr %s239, 8
        %s241 = scalar_lea.vmem %s5, %s240
        %s242 = smul.u32 5, %s17
        %v244 = vld [vmem:[%s235] sm:$0xff]
        %v245 = vld [vmem:[%s235 + $0x8] sm:$0xff]
        %v246 = vld [vmem:[%s235 + $0x10] sm:$0xff]
        %v247 = vld [vmem:[%s235 + $0x18] sm:$0xff]
        %v248 = vld [vmem:[%s235 + $0x20] sm:$0xff]
        %v249 = vlaneseq
        %v250 = vand.u32 %v249, 127
        %251 = vset.pattern.permute.xlu0 0
        %252 = vperm.xlu0 %251, %v244
        %v253 = vpop.permute.xlu0 %252
        %254 = vset.pattern.permute.xlu0 0
        %255 = vperm.xlu0 %254, %v245
        %v256 = vpop.permute.xlu0 %255
        %257 = vset.pattern.permute.xlu0 0
        %258 = vperm.xlu0 %257, %v246
        %v259 = vpop.permute.xlu0 %258
        %260 = vset.pattern.permute.xlu0 0
        %261 = vperm.xlu0 %260, %v247
        %v262 = vpop.permute.xlu0 %261
        %263 = vset.pattern.permute.xlu0 0
        %264 = vperm.xlu0 %263, %v248
        %v265 = vpop.permute.xlu0 %264
        %vm266 = vcmp.eq.s32.totalorder %v250, %v253
        %vm267 = vcmp.eq.s32.totalorder %v250, %v256
        %vm268 = vcmp.eq.s32.totalorder %v250, %v259
        %vm269 = vcmp.eq.s32.totalorder %v250, %v262
        %vm270 = vcmp.eq.s32.totalorder %v250, %v265
        %271 = vset.pattern.permute.xlu0 1
        %272 = vperm.xlu0 %271, %v244
        %v273 = vpop.permute.xlu0 %272
        %274 = vset.pattern.permute.xlu0 1
        %275 = vperm.xlu0 %274, %v245
        %v276 = vpop.permute.xlu0 %275
        %277 = vset.pattern.permute.xlu0 1
        %278 = vperm.xlu0 %277, %v246
        %v279 = vpop.permute.xlu0 %278
        %280 = vset.pattern.permute.xlu0 1
        %281 = vperm.xlu0 %280, %v247
        %v282 = vpop.permute.xlu0 %281
        %283 = vset.pattern.permute.xlu0 1
        %284 = vperm.xlu0 %283, %v248
        %v285 = vpop.permute.xlu0 %284
        %vm286 = vcmp.eq.s32.totalorder %v250, %v273
        %vm287 = vcmp.eq.s32.totalorder %v250, %v276
        %vm288 = vcmp.eq.s32.totalorder %v250, %v279
        %vm289 = vcmp.eq.s32.totalorder %v250, %v282
        %vm290 = vcmp.eq.s32.totalorder %v250, %v285
        %vm291 = vmor %vm266, %vm286
        %vm292 = vmor %vm267, %vm287
        %vm293 = vmor %vm268, %vm288
        %vm294 = vmor %vm269, %vm289
        %vm295 = vmor %vm270, %vm290
        %296 = vset.pattern.permute.xlu0 2
        %297 = vperm.xlu0 %296, %v244
        %v298 = vpop.permute.xlu0 %297
        %299 = vset.pattern.permute.xlu0 2
        %300 = vperm.xlu0 %299, %v245
        %v301 = vpop.permute.xlu0 %300
        %302 = vset.pattern.permute.xlu0 2
        %303 = vperm.xlu0 %302, %v246
        %v304 = vpop.permute.xlu0 %303
        %305 = vset.pattern.permute.xlu0 2
        %306 = vperm.xlu0 %305, %v247
        %v307 = vpop.permute.xlu0 %306
        %308 = vset.pattern.permute.xlu0 2
        %309 = vperm.xlu0 %308, %v248
        %v310 = vpop.permute.xlu0 %309
        %vm311 = vcmp.eq.s32.totalorder %v250, %v298
        %vm312 = vcmp.eq.s32.totalorder %v250, %v301
        %vm313 = vcmp.eq.s32.totalorder %v250, %v304
        %vm314 = vcmp.eq.s32.totalorder %v250, %v307
        %vm315 = vcmp.eq.s32.totalorder %v250, %v310
        %vm316 = vmor %vm291, %vm311
        %vm317 = vmor %vm292, %vm312
        %vm318 = vmor %vm293, %vm313
        %vm319 = vmor %vm294, %vm314
        %vm320 = vmor %vm295, %vm315
        %v321 = vsel %vm316, 1, 0
        %v322 = vsel %vm317, 1, 0
        %v323 = vsel %vm318, 1, 0
        %v324 = vsel %vm319, 1, 0
        %v325 = vsel %vm320, 1, 0
        %v326 = vcvt.s32.f32 %v321
        %v327 = vcvt.s32.f32 %v322
        %v328 = vcvt.s32.f32 %v323
        %v329 = vcvt.s32.f32 %v324
        %v330 = vcvt.s32.f32 %v325
        %v331 = vpack.c.bf16 %v327, %v326
        %v332 = vpack.c.bf16 %v329, %v328
        %v333 = vpack.c.bf16 %v330, %v330
        %v334 = vld [vmem:[%s1] sm:$0xf]
        %v335 = vld [vmem:[%s1 + $0x4] sm:$0xf]
        %v336 = vld [vmem:[%s1 + $0x8] sm:$0xf]
        %v337 = vld [vmem:[%s1 + $0xc] sm:$0xf]
        %v338 = vld [vmem:[%s1 + $0x10] sm:$0xf]
        %v339 = vld [vmem:[%s1 + $0x14] sm:$0xf]
        %v340 = vld [vmem:[%s1 + $0x18] sm:$0xf]
        %v341 = vld [vmem:[%s1 + $0x1c] sm:$0xf]
        %v342 = vld [vmem:[%s1 + $0x20] sm:$0xf]
        %v343 = vld [vmem:[%s1 + $0x24] sm:$0xf]
        %v344 = vld [vmem:[%s1 + $0x28] sm:$0xf]
        %v345 = vld [vmem:[%s1 + $0x2c] sm:$0xf]
        %v346 = vld [vmem:[%s1 + $0x30] sm:$0xf]
        %v347 = vld [vmem:[%s1 + $0x34] sm:$0xf]
        %v348 = vld [vmem:[%s1 + $0x38] sm:$0xf]
        %v349 = vld [vmem:[%s1 + $0x3c] sm:$0xf]
        %v350 = vld [vmem:[%s2] sm:$0x1]
        %v352 = vlaneseq
        %v353 = vshrl.u32 %v352, 7
        %v354 = vsub.s32 0, %v353
        %v355 = vrot.slane %v350, %v354
        %v373 = vunpack.c.l.b16 %v334
        %v374 = vunpack.c.l.b16 %v335
        %v375 = vunpack.c.l.b16 %v336
        %v376 = vunpack.c.l.b16 %v337
        %v377 = vunpack.c.l.b16 %v338
        %v378 = vunpack.c.l.b16 %v339
        %v379 = vunpack.c.l.b16 %v340
        %v380 = vunpack.c.l.b16 %v341
        %v381 = vunpack.c.l.b16 %v342
        %v382 = vunpack.c.l.b16 %v343
        %v383 = vunpack.c.l.b16 %v344
        %v384 = vunpack.c.l.b16 %v345
        %v385 = vunpack.c.l.b16 %v346
        %v386 = vunpack.c.l.b16 %v347
        %v387 = vunpack.c.l.b16 %v348
        %v388 = vunpack.c.l.b16 %v349
        %v389 = vpack.c.b16 %v374, %v373
        %v390 = vpack.c.b16 %v376, %v375
        %v391 = vpack.c.b16 %v378, %v377
        %v392 = vpack.c.b16 %v380, %v379
        %v393 = vpack.c.b16 %v382, %v381
        %v394 = vpack.c.b16 %v384, %v383
        %v395 = vpack.c.b16 %v386, %v385
        %v396 = vpack.c.b16 %v388, %v387
        %405 = vmatprep.subr.bf16.mxu0 0
        %406 = vmatpush1.bf16.msra.mxu0 %v396
        %407 = vmatprep.subr.bf16.mxu0 0
        %408 = vmatpush1.bf16.msra.mxu0 %v395
        %409 = vmatprep.subr.bf16.mxu0 0
        %410 = vmatpush1.bf16.msra.mxu0 %v394
        %411 = vmatprep.subr.bf16.mxu0 0
        %412 = vmatpush1.bf16.msra.mxu0 %v393
        %413 = vmatprep.subr.bf16.mxu0 0
        %414 = vmatpush1.bf16.msra.mxu0 %v392
        %415 = vmatprep.subr.bf16.mxu0 0
        %416 = vmatpush1.bf16.msra.mxu0 %v391
        %417 = vmatprep.subr.bf16.mxu0 0
        %418 = vmatpush1.bf16.msra.mxu0 %v390
        %419 = vmatprep.subr.bf16.mxu0 0
        %420 = vmatpush1.bf16.msra.mxu0 %v389
        %421 = vmatprep.subr.bf16.mxu0 0
        %422 = vmatpush2.bf16.msra.mxu0 0
        %423 = vmatprep.subr.bf16.mxu0 0
        %424 = vmatpush2.bf16.msra.mxu0 0
        %425 = vmatprep.subr.bf16.mxu0 0
        %426 = vmatpush2.bf16.msra.mxu0 0
        %427 = vmatprep.subr.bf16.mxu0 0
        %428 = vmatpush2.bf16.msra.mxu0 0
        %429 = vmatprep.subr.bf16.mxu0 0
        %430 = vmatpush2.bf16.msra.mxu0 0
        %431 = vmatprep.subr.bf16.mxu0 0
        %432 = vmatpush2.bf16.msra.mxu0 0
        %433 = vmatprep.subr.bf16.mxu0 0
        %434 = vmatpush2.bf16.msra.mxu0 0
        %435 = vmatprep.subr.bf16.mxu0 0
        %436 = vmatpush2.bf16.msra.mxu0 0
        %437 = vmatprep.mubr.bf16.mxu0 0
        %438 = vmatmul.mubr.bf16.gmra.mxu0 %v331
        %v439 = vpop.f32.mrf.mxu0
        %v440 = vadd.f32 %v355, %v439
        %v441 = vpop.f32.mrf.mxu0
        %v442 = vpop.f32.mrf.mxu0
        %v443 = vadd.f32 %v355, %v442
        %v444 = vpop.f32.mrf.mxu0
        %445 = vmatprep.mubr.bf16.mxu0 0
        %446 = vmatmul.mubr.bf16.gmra.mxu0 %v332
        %v447 = vpop.f32.mrf.mxu0
        %v448 = vadd.f32 %v355, %v447
        %v449 = vpop.f32.mrf.mxu0
        %v450 = vpop.f32.mrf.mxu0
        %v451 = vadd.f32 %v355, %v450
        %v452 = vpop.f32.mrf.mxu0
        %453 = vmatprep.mubr.bf16.mxu0 0
        %454 = vmatmul.mubr.bf16.gmra.mxu0 %v333
        %v455 = vpop.f32.mrf.mxu0
        %v456 = vadd.f32 %v355, %v455
        %v457 = vpop.f32.mrf.mxu0
        %v458 = vpop.f32.mrf.mxu0
        %v459 = vpop.f32.mrf.mxu0
        %460 = vdwg.mxu0
        %v461 = vmax.f32 %v440, 0.0
        %v462 = vmax.f32 %v443, 0.0
        %v463 = vmax.f32 %v448, 0.0
        %v464 = vmax.f32 %v451, 0.0
        %v465 = vmax.f32 %v456, 0.0
        %v466 = vld [vmem:[#allocation2] sm:$0xff]
        %v467 = vld [vmem:[#allocation2 + $0x8] sm:$0xff]
        %v468 = vld [vmem:[#allocation2 + $0x10] sm:$0xff]
        %v469 = vld [vmem:[#allocation2 + $0x18] sm:$0xff]
        %v470 = vld [vmem:[#allocation2 + $0x20] sm:$0xff]
        %v471 = vld [vmem:[#allocation2 + $0x28] sm:$0xff]
        %v472 = vld [vmem:[#allocation2 + $0x30] sm:$0xff]
        %v473 = vld [vmem:[#allocation2 + $0x38] sm:$0xff]
        %v474 = vld [vmem:[#allocation2 + $0x40] sm:$0xff]
        %v475 = vld [vmem:[#allocation2 + $0x48] sm:$0xff]
        %v476 = vld [vmem:[#allocation2 + $0x50] sm:$0xff]
        %v477 = vld [vmem:[#allocation2 + $0x58] sm:$0xff]
        %v478 = vld [vmem:[#allocation2 + $0x60] sm:$0xff]
        %v479 = vld [vmem:[#allocation2 + $0x68] sm:$0xff]
        %v480 = vld [vmem:[#allocation2 + $0x70] sm:$0xff]
        %v481 = vld [vmem:[#allocation2 + $0x78] sm:$0xff]
        %482 = vmatprep.subr.mxu0 0.0
        %483 = vmatpush1.msra.mxu0 %v481
        %484 = vmatprep.subr.mxu0 0.0
        %485 = vmatpush1.msra.mxu0 %v480
        %486 = vmatprep.subr.mxu0 0.0
        %487 = vmatpush1.msra.mxu0 %v479
        %488 = vmatprep.subr.mxu0 0.0
        %489 = vmatpush1.msra.mxu0 %v478
        %490 = vmatprep.subr.mxu0 0.0
        %491 = vmatpush1.msra.mxu0 %v477
        %492 = vmatprep.subr.mxu0 0.0
        %493 = vmatpush1.msra.mxu0 %v476
        %494 = vmatprep.subr.mxu0 0.0
        %495 = vmatpush1.msra.mxu0 %v475
        %496 = vmatprep.subr.mxu0 0.0
        %497 = vmatpush1.msra.mxu0 %v474
        %498 = vmatprep.subr.mxu0 0.0
        %499 = vmatpush1.msra.mxu0 %v473
        %500 = vmatprep.subr.mxu0 0.0
        %501 = vmatpush1.msra.mxu0 %v472
        %502 = vmatprep.subr.mxu0 0.0
        %503 = vmatpush1.msra.mxu0 %v471
        %504 = vmatprep.subr.mxu0 0.0
        %505 = vmatpush1.msra.mxu0 %v470
        %506 = vmatprep.subr.mxu0 0.0
        %507 = vmatpush1.msra.mxu0 %v469
        %508 = vmatprep.subr.mxu0 0.0
        %509 = vmatpush1.msra.mxu0 %v468
        %510 = vmatprep.subr.mxu0 0.0
        %511 = vmatpush1.msra.mxu0 %v467
        %512 = vmatprep.subr.mxu0 0.0
        %513 = vmatpush1.msra.mxu0 %v466
        %514 = vmatprep.subr.mxu0 0.0
        %515 = vmatpush2.msra.mxu0 0.0
        %516 = vmatprep.subr.mxu0 0.0
        %517 = vmatpush2.msra.mxu0 0.0
        %518 = vmatprep.subr.mxu0 0.0
        %519 = vmatpush2.msra.mxu0 0.0
        %520 = vmatprep.subr.mxu0 0.0
        %521 = vmatpush2.msra.mxu0 0.0
        %522 = vmatprep.subr.mxu0 0.0
        %523 = vmatpush2.msra.mxu0 0.0
        %524 = vmatprep.subr.mxu0 0.0
        %525 = vmatpush2.msra.mxu0 0.0
        %526 = vmatprep.subr.mxu0 0.0
        %527 = vmatpush2.msra.mxu0 0.0
        %528 = vmatprep.subr.mxu0 0.0
        %529 = vmatpush2.msra.mxu0 0.0
        %530 = vmatprep.subr.mxu0 0.0
        %531 = vmatpush2.msra.mxu0 0.0
        %532 = vmatprep.subr.mxu0 0.0
        %533 = vmatpush2.msra.mxu0 0.0
        %534 = vmatprep.subr.mxu0 0.0
        %535 = vmatpush2.msra.mxu0 0.0
        %536 = vmatprep.subr.mxu0 0.0
        %537 = vmatpush2.msra.mxu0 0.0
        %538 = vmatprep.subr.mxu0 0.0
        %539 = vmatpush2.msra.mxu0 0.0
        %540 = vmatprep.subr.mxu0 0.0
        %541 = vmatpush2.msra.mxu0 0.0
        %542 = vmatprep.subr.mxu0 0.0
        %543 = vmatpush2.msra.mxu0 0.0
        %544 = vmatprep.subr.mxu0 0.0
        %545 = vmatpush2.msra.mxu0 0.0
        %546 = vmatprep.mubr.f32.mxu0 0.0
        %547 = vmatmul.mubr.f32.gmra.mxu0 %v461
        %v548 = vpop.f32.mrf.mxu0
        %v549 = vadd.f32 0.0, %v548
        %v550 = vpop.f32.mrf.mxu0
        %551 = vmatprep.mubr.f32.mxu0 0.0
        %552 = vmatmul.mubr.f32.gmra.mxu0 %v462
        %v553 = vpop.f32.mrf.mxu0
        %v554 = vadd.f32 0.0, %v553
        %v555 = vpop.f32.mrf.mxu0
        %556 = vmatprep.mubr.f32.mxu0 0.0
        %557 = vmatmul.mubr.f32.gmra.mxu0 %v463
        %v558 = vpop.f32.mrf.mxu0
        %v559 = vadd.f32 0.0, %v558
        %v560 = vpop.f32.mrf.mxu0
        %561 = vmatprep.mubr.f32.mxu0 0.0
        %562 = vmatmul.mubr.f32.gmra.mxu0 %v464
        %v563 = vpop.f32.mrf.mxu0
        %v564 = vadd.f32 0.0, %v563
        %v565 = vpop.f32.mrf.mxu0
        %566 = vmatprep.mubr.f32.mxu0 0.0
        %567 = vmatmul.mubr.f32.gmra.mxu0 %v465
        %v568 = vpop.f32.mrf.mxu0
        %v569 = vadd.f32 0.0, %v568
        %v570 = vpop.f32.mrf.mxu0
        %571 = vdwg.mxu0
        %v572 = vld [vmem:[%s4] sm:$0x1]
        %v574 = vlaneseq
        %v575 = vshrl.u32 %v574, 7
        %v576 = vsub.s32 0, %v575
        %v577 = vrot.slane %v572, %v576
        %v579 = vadd.f32 %v549, %v577
        %v580 = vadd.f32 %v554, %v577
        %v581 = vadd.f32 %v559, %v577
        %v582 = vadd.f32 %v564, %v577
        %v583 = vadd.f32 %v569, %v577
        %vm584 = vcmask 220160
        %585 = vst.msk [vmem:[%s241] sm:$0xff] %vm584, %v579
        %586 = vst.msk [vmem:[%s241 + $0x8] sm:$0xff] %vm584, %v580
        %587 = vst.msk [vmem:[%s241 + $0x10] sm:$0xff] %vm584, %v581
        %588 = vst.msk [vmem:[%s241 + $0x18] sm:$0xff] %vm584, %v582
        %589 = vst.msk [vmem:[%s241 + $0x20] sm:$0xff] %vm584, %v583
        %s590 = smul.u32 5, %s17
        %p591 = scmp.lt.s32.totalorder %s590, 9
        %s592 = scalar_select %p591, %s590, 9
        %s593 = smul.addr %s592, 8
        %s594 = scalar_lea.vmem %s5, %s593
        // Predicated region
        $region45: #{tpu_custom_call.1} parent=39 // pred_check
          %p595 = pneg %p145
        $region46: #{tpu_custom_call.1} parent=39 // pred_check_branch
          %597 = sbr.rel (%p595) target = $region48
        $region47: #{tpu_custom_call.1} parent=39 // pred_region
          %s598 = smul.u32 5, %s17
        $region48: #{tpu_custom_call.1} parent=39 // pred_fallthru
          _
      $region40: #{tpu_custom_call.1} parent=5 // pred_fallthru
        _
      %p599 = scmp.le.s32.totalorder 2, %s12
      // Predicated region
      $region49: #{tpu_custom_call.1} parent=5 // pred_check
        %p600 = pneg %p599
      $region50: #{tpu_custom_call.1} parent=5 // pred_check_branch
        %602 = sbr.rel (%p600) target = $region52
      $region51: #{tpu_custom_call.1} parent=5 // pred_region
        %s603 = ssub.s32 %s12, 2
        // Predicated region
        $region53: #{tpu_custom_call.1} parent=51 // pred_check
          %p604 = pneg %p151
        $region54: #{tpu_custom_call.1} parent=51 // pred_check_branch
          %606 = sbr.rel (%p604) target = $region56
        $region55: #{tpu_custom_call.1} parent=51 // pred_region
          %s607 = smul.u32 5, %s18
          %p608 = scmp.lt.s32.totalorder %s607, 9
          %s609 = scalar_select %p608, %s607, 9
          %s610 = smul.addr %s609, 8
          %s611 = scalar_lea.vmem %s5, %s610
        $region56: #{tpu_custom_call.1} parent=51 // pred_fallthru
          _
      $region52: #{tpu_custom_call.1} parent=5 // pred_fallthru
        _
    $region6: #{tpu_custom_call.1} parent=1 // loop_footer
      %s16 = sadd.s32 1, %s12
    $region7: #{tpu_custom_call.1} parent=1 // loop_footer_branch
      %11 = sbr.rel target = $region3
    $region8: #{tpu_custom_call.1} parent=1 // loop_exit
      _
    %612 = vsyncpa [#allocation3], 1
    %s613 = scalar_lea.sflag [#allocation3], 1
    %614 = vsyncpa %s613, 1

</llo_original>
